<compile_context>
chip_gen: v6e
topology: v6e:2x2x1
jax: 0.10.0
libtpu: 0.0.40
codegen_flags: <defaults>
</compile_context>

<pallas_src>
import jax
import jax.numpy as jnp
import numpy as np
from jax.experimental import pallas as pl
from jax.experimental.pallas import tpu as pltpu


def noise_basic_block_kernel(x_ref, n1_ref, n2_ref, w1_ref, b1_ref,
                             w2_ref, b2_ref, o_ref):
    # x_ref: (C, T_HW) — channels on sublanes, spatial positions on lanes.
    x = x_ref[...].astype(jnp.float32)

    # --- NoiseLayer 1: add noise -> ReLU.  BN1 (pre-conv) and BN2 (post-conv)
    #     are folded into w1/b1 on the host, so the 1x1 conv is one matmul. ---
    y = jnp.maximum(x + n1_ref[...], 0.0)
    y = jnp.dot(w1_ref[...], y, preferred_element_type=jnp.float32) + b1_ref[...]
    # MaxPool2d(kernel=1, stride=1) is the identity.
    y = jnp.maximum(y, 0.0)

    # --- NoiseLayer 2: add noise -> ReLU.  BN3/BN4 folded into w2/b2. ---
    y = jnp.maximum(y + n2_ref[...], 0.0)
    y = jnp.dot(w2_ref[...], y, preferred_element_type=jnp.float32) + b2_ref[...]

    # --- residual add -> final ReLU ---
    o_ref[...] = jnp.maximum(y + x, 0.0).astype(o_ref.dtype)


def noise_basic_block(x_nchw, params, *, t_hw=None):
    """params hold BN-folded weights: w (C_out, C_in), b (C_out, 1), noise (C, HW)."""
    N, C, H, W = x_nchw.shape
    HW = H * W
    if t_hw is None:
        t_hw = HW                              # whole sample per grid step
    assert HW % t_hw == 0, "spatial tile must divide H*W"
    assert t_hw == HW or t_hw % 128 == 0, "spatial tile must be lane-aligned"

    x = x_nchw.reshape(N, C, HW)               # free reshape; no transpose
    n1, n2 = params["noise1"], params["noise2"]    # (C, HW)
    w1, b1 = params["w1"], params["b1"]            # (C, C), (C, 1)
    w2, b2 = params["w2"], params["b2"]

    out = pl.pallas_call(
        noise_basic_block_kernel,
        out_shape=jax.ShapeDtypeStruct((N, C, HW), jnp.float32),
        grid_spec=pltpu.PrefetchScalarGridSpec(
            num_scalar_prefetch=0,
            # batch innermost: noise/weight block indices are constant along it,
            # so those blocks are DMA'd once and stay resident in VMEM.
            grid=(HW // t_hw, N),
            in_specs=[
                pl.BlockSpec((None, C, t_hw), lambda t, n: (n, 0, t)),   # x
                pl.BlockSpec((C, t_hw), lambda t, n: (0, t)),            # noise1
                pl.BlockSpec((C, t_hw), lambda t, n: (0, t)),            # noise2
                pl.BlockSpec((C, C), lambda t, n: (0, 0)),               # w1 (BN-folded)
                pl.BlockSpec((C, 1), lambda t, n: (0, 0)),               # b1 (BN-folded)
                pl.BlockSpec((C, C), lambda t, n: (0, 0)),               # w2 (BN-folded)
                pl.BlockSpec((C, 1), lambda t, n: (0, 0)),               # b2 (BN-folded)
            ],
            out_specs=pl.BlockSpec((None, C, t_hw), lambda t, n: (n, 0, t)),
        ),
        compiler_params=pltpu.CompilerParams(
            dimension_semantics=("parallel", "parallel")),
    )(x, n1, n2, w1, b1, w2, b2)

    return out.reshape(N, C, H, W)


# ----------------------------------------------------------------------------
# Raw (PyTorch-style) parameters, host-side BN folding, and a pure-JAX reference
# ----------------------------------------------------------------------------

def make_raw_params(key, C, H, W, level=0.2):
    """Unfolded params mirroring the PyTorch module (noise buffers, 1x1 convs, 4 BNs)."""
    ks = jax.random.split(key, 8)
    # NoiseLayer buffers: uniform [0,1) of shape (C,H,W) -> (2u-1)*level.
    noise1 = (2.0 * jax.random.uniform(ks[0], (C, H, W)) - 1.0) * level
    noise2 = (2.0 * jax.random.uniform(ks[1], (C, H, W)) - 1.0) * level
    # 1x1 conv weights stored (C_in, C_out) and biases (C_out,).
    w1 = jax.random.normal(ks[2], (C, C), jnp.float32) * 0.2
    b1 = jax.random.normal(ks[3], (C,), jnp.float32) * 0.1
    w2 = jax.random.normal(ks[4], (C, C), jnp.float32) * 0.2
    b2 = jax.random.normal(ks[5], (C,), jnp.float32) * 0.1
    # Four inference-mode BatchNorms as per-channel (scale, shift).
    bn_scale = 1.0 + 0.1 * jax.random.normal(ks[6], (4, C), jnp.float32)
    bn_shift = 0.1 * jax.random.normal(ks[7], (4, C), jnp.float32)
    return dict(noise1=noise1, noise2=noise2, w1=w1, b1=b1, w2=w2, b2=b2,
                bn_scale=bn_scale, bn_shift=bn_shift)


def fold_params(raw):
    """Fold BN1/BN2 into conv1 and BN3/BN4 into conv2; transpose for W @ x form."""
    a, c = raw["bn_scale"], raw["bn_shift"]
    w1, b1 = raw["w1"], raw["b1"]
    w2, b2 = raw["w2"], raw["b2"]
    C = w1.shape[0]
    # channels-last: ((y*a_pre + c_pre) @ w + b) * a_post + c_post
    #   == y @ (a_pre[:,None] * w * a_post[None,:]) + ((c_pre @ w + b)*a_post + c_post)
    W1 = (a[0][:, None] * w1 * a[1][None, :]).T          # (C_out, C_in)
    B1 = ((c[0] @ w1 + b1) * a[1] + c[1])[:, None]       # (C_out, 1)
    W2 = (a[2][:, None] * w2 * a[3][None, :]).T
    B2 = ((c[2] @ w2 + b2) * a[3] + c[3])[:, None]
    return dict(noise1=raw["noise1"].reshape(C, -1),
                noise2=raw["noise2"].reshape(C, -1),
                w1=W1, b1=B1, w2=W2, b2=B2)


def reference(x_nchw, raw):
    """Pure-JAX reference of the unfolded forward pass (for validation)."""
    N, C, H, W = x_nchw.shape
    HW = H * W
    x = jnp.transpose(x_nchw, (0, 2, 3, 1)).reshape(N, HW, C).astype(jnp.float32)
    n1 = raw["noise1"].reshape(C, HW).T[None]
    n2 = raw["noise2"].reshape(C, HW).T[None]
    a, c = raw["bn_scale"], raw["bn_shift"]
    y = jnp.maximum(x + n1, 0.0)
    y = y * a[0] + c[0]
    y = y @ raw["w1"] + raw["b1"]
    y = y * a[1] + c[1]
    y = jnp.maximum(y, 0.0)
    y = jnp.maximum(y + n2, 0.0)
    y = y * a[2] + c[2]
    y = y @ raw["w2"] + raw["b2"]
    y = y * a[3] + c[3]
    y = jnp.maximum(y + x, 0.0)
    return y.reshape(N, H, W, C).transpose(0, 3, 1, 2)


if __name__ == "__main__":
    N, C, H, W = 2, 8, 16, 16        # in_planes = planes = 8 (residual requires equal)
    key = jax.random.PRNGKey(0)
    k_x, k_p = jax.random.split(key)
    x = jax.random.normal(k_x, (N, C, H, W), jnp.float32)

    raw = make_raw_params(k_p, C, H, W, level=0.2)
    params = fold_params(raw)

    out = jax.block_until_ready(noise_basic_block(x, params))
    ref = jax.block_until_ready(reference(x, raw))
    np.testing.assert_allclose(np.asarray(out), np.asarray(ref), rtol=1e-4, atol=1e-4)
    print("KERNEL_OK")
</pallas_src>

<mosaic_0001>
module attributes {stable_mosaic.version = 11 : i64} {
  func.func @noise_basic_block_kernel(%arg0: i32, %arg1: i32, %arg2: memref<1x8x256xf32, #tpu.memory_space<vmem>>, %arg3: memref<8x256xf32, #tpu.memory_space<vmem>>, %arg4: memref<8x256xf32, #tpu.memory_space<vmem>>, %arg5: memref<8x8xf32, #tpu.memory_space<vmem>>, %arg6: memref<8x1xf32, #tpu.memory_space<vmem>>, %arg7: memref<8x8xf32, #tpu.memory_space<vmem>>, %arg8: memref<8x1xf32, #tpu.memory_space<vmem>>, %arg9: memref<1x8x256xf32, #tpu.memory_space<vmem>>) attributes {dimension_semantics = [#tpu.dimension_semantics<parallel>, #tpu.dimension_semantics<parallel>], iteration_bounds = array<i64: 1, 2>, scalar_prefetch = 0 : i64, scratch_operands = 0 : i64, tpu.core_type = #tpu.core_type<tc>, window_params = [{transform_indices = @transform_0, window_bounds = array<i64: 1, 8, 256>}, {transform_indices = @transform_1, window_bounds = array<i64: 8, 256>}, {transform_indices = @transform_2, window_bounds = array<i64: 8, 256>}, {pipeline_mode = #tpu.pipeline_mode<synchronous>, transform_indices = @transform_3, window_bounds = array<i64: 8, 8>}, {pipeline_mode = #tpu.pipeline_mode<synchronous>, transform_indices = @transform_4, window_bounds = array<i64: 8, 1>}, {pipeline_mode = #tpu.pipeline_mode<synchronous>, transform_indices = @transform_5, window_bounds = array<i64: 8, 8>}, {pipeline_mode = #tpu.pipeline_mode<synchronous>, transform_indices = @transform_6, window_bounds = array<i64: 8, 1>}, {transform_indices = @transform_7, window_bounds = array<i64: 1, 8, 256>}]} {
    %c0 = arith.constant 0 : index
    %c0_0 = arith.constant 0 : index
    %c0_1 = arith.constant 0 : index
    %0 = vector.load %arg2[%c0, %c0_0, %c0_1] : memref<1x8x256xf32, #tpu.memory_space<vmem>>, vector<1x8x256xf32>
    %1 = vector.shape_cast %0 : vector<1x8x256xf32> to vector<8x256xf32>
    %c0_2 = arith.constant 0 : index
    %c0_3 = arith.constant 0 : index
    %2 = vector.load %arg3[%c0_2, %c0_3] : memref<8x256xf32, #tpu.memory_space<vmem>>, vector<8x256xf32>
    %3 = arith.addf %1, %2 : vector<8x256xf32>
    %cst = arith.constant 0.000000e+00 : f32
    %4 = vector.broadcast %cst : f32 to vector<8x256xf32>
    %5 = arith.maximumf %3, %4 : vector<8x256xf32>
    %c0_4 = arith.constant 0 : index
    %c0_5 = arith.constant 0 : index
    %6 = vector.load %arg5[%c0_4, %c0_5] : memref<8x8xf32, #tpu.memory_space<vmem>>, vector<8x8xf32>
    %cst_6 = arith.constant dense<0.000000e+00> : vector<8x256xf32>
    %7 = tpu.matmul %6, %5, %cst_6 {dimension_numbers = #tpu.dot_dimension_numbers<[1], [0], [0], [1], [0, 0, 1, 1], [], []>} : vector<8x8xf32>, vector<8x256xf32>, vector<8x256xf32> -> vector<8x256xf32>
    %c0_7 = arith.constant 0 : index
    %c0_8 = arith.constant 0 : index
    %8 = vector.load %arg6[%c0_7, %c0_8] : memref<8x1xf32, #tpu.memory_space<vmem>>, vector<8x1xf32>
    %9 = vector.broadcast %8 : vector<8x1xf32> to vector<8x256xf32>
    %10 = arith.addf %7, %9 : vector<8x256xf32>
    %cst_9 = arith.constant 0.000000e+00 : f32
    %11 = vector.broadcast %cst_9 : f32 to vector<8x256xf32>
    %12 = arith.maximumf %10, %11 : vector<8x256xf32>
    %c0_10 = arith.constant 0 : index
    %c0_11 = arith.constant 0 : index
    %13 = vector.load %arg4[%c0_10, %c0_11] : memref<8x256xf32, #tpu.memory_space<vmem>>, vector<8x256xf32>
    %14 = arith.addf %12, %13 : vector<8x256xf32>
    %cst_12 = arith.constant 0.000000e+00 : f32
    %15 = vector.broadcast %cst_12 : f32 to vector<8x256xf32>
    %16 = arith.maximumf %14, %15 : vector<8x256xf32>
    %c0_13 = arith.constant 0 : index
    %c0_14 = arith.constant 0 : index
    %17 = vector.load %arg7[%c0_13, %c0_14] : memref<8x8xf32, #tpu.memory_space<vmem>>, vector<8x8xf32>
    %cst_15 = arith.constant dense<0.000000e+00> : vector<8x256xf32>
    %18 = tpu.matmul %17, %16, %cst_15 {dimension_numbers = #tpu.dot_dimension_numbers<[1], [0], [0], [1], [0, 0, 1, 1], [], []>} : vector<8x8xf32>, vector<8x256xf32>, vector<8x256xf32> -> vector<8x256xf32>
    %c0_16 = arith.constant 0 : index
    %c0_17 = arith.constant 0 : index
    %19 = vector.load %arg8[%c0_16, %c0_17] : memref<8x1xf32, #tpu.memory_space<vmem>>, vector<8x1xf32>
    %20 = vector.broadcast %19 : vector<8x1xf32> to vector<8x256xf32>
    %21 = arith.addf %18, %20 : vector<8x256xf32>
    %22 = arith.addf %21, %1 : vector<8x256xf32>
    %cst_18 = arith.constant 0.000000e+00 : f32
    %23 = vector.broadcast %cst_18 : f32 to vector<8x256xf32>
    %24 = arith.maximumf %22, %23 : vector<8x256xf32>
    %c0_19 = arith.constant 0 : index
    %c0_20 = arith.constant 0 : index
    %c0_21 = arith.constant 0 : index
    %25 = vector.load %arg9[%c0_19, %c0_20, %c0_21] : memref<1x8x256xf32, #tpu.memory_space<vmem>>, vector<1x8x256xf32>
    %26 = vector.shape_cast %25 : vector<1x8x256xf32> to vector<8x256xf32>
    %27 = vector.shape_cast %24 : vector<8x256xf32> to vector<1x8x256xf32>
    tpu.vector_store %arg9[%c0_19, %c0_20, %c0_21], %27 {strides = array<i32>} : memref<1x8x256xf32, #tpu.memory_space<vmem>>, vector<1x8x256xf32>,
    return
  }
  func.func @transform_0(%arg0: i32, %arg1: i32) -> (i32, i32, i32) {
    %c0_i32 = arith.constant 0 : i32
    %c0_i32_0 = arith.constant 0 : i32
    return %arg1, %c0_i32, %arg0 : i32, i32, i32
  }
  func.func @transform_1(%arg0: i32, %arg1: i32) -> (i32, i32) {
    %c0_i32 = arith.constant 0 : i32
    %c0_i32_0 = arith.constant 0 : i32
    return %c0_i32, %arg0 : i32, i32
  }
  func.func @transform_2(%arg0: i32, %arg1: i32) -> (i32, i32) {
    %c0_i32 = arith.constant 0 : i32
    %c0_i32_0 = arith.constant 0 : i32
    return %c0_i32, %arg0 : i32, i32
  }
  func.func @transform_3(%arg0: i32, %arg1: i32) -> (i32, i32) {
    %c0_i32 = arith.constant 0 : i32
    %c0_i32_0 = arith.constant 0 : i32
    %c0_i32_1 = arith.constant 0 : i32
    return %c0_i32, %c0_i32_0 : i32, i32
  }
  func.func @transform_4(%arg0: i32, %arg1: i32) -> (i32, i32) {
    %c0_i32 = arith.constant 0 : i32
    %c0_i32_0 = arith.constant 0 : i32
    %c0_i32_1 = arith.constant 0 : i32
    return %c0_i32, %c0_i32_0 : i32, i32
  }
  func.func @transform_5(%arg0: i32, %arg1: i32) -> (i32, i32) {
    %c0_i32 = arith.constant 0 : i32
    %c0_i32_0 = arith.constant 0 : i32
    %c0_i32_1 = arith.constant 0 : i32
    return %c0_i32, %c0_i32_0 : i32, i32
  }
  func.func @transform_6(%arg0: i32, %arg1: i32) -> (i32, i32) {
    %c0_i32 = arith.constant 0 : i32
    %c0_i32_0 = arith.constant 0 : i32
    %c0_i32_1 = arith.constant 0 : i32
    return %c0_i32, %c0_i32_0 : i32, i32
  }
  func.func @transform_7(%arg0: i32, %arg1: i32) -> (i32, i32, i32) {
    %c0_i32 = arith.constant 0 : i32
    %c0_i32_0 = arith.constant 0 : i32
    return %arg1, %c0_i32, %arg0 : i32, i32, i32
  }
}

</mosaic_0001>

<llo_original>
// kernel: tpu_custom_call.1
$region0: #{tpu_custom_call.1}
  #allocation0 [shape = 'u32[]', space=smem, size = 0x4, offset = 0x4, fixed_abs, tag = 'smem constant byte address 0x4 - core index']
  #allocation1 [shape = 'u32[144,128]{1,0:T(1,128)}', space=vmem, size = 0x12000, scoped, tag = 'internal scratch']
  %s0 = inlined_call_operand.hbm [shape: f32[2,8,256], index: 0, kind: input, shape index: {}]
  %s1 = inlined_call_operand.vmem [shape: f32[8,256], index: 1, kind: input, shape index: {}]
  %s2 = inlined_call_operand.hbm [shape: f32[8,256], index: 2, kind: input, shape index: {}]
  %s3 = inlined_call_operand.hbm [shape: f32[8,8], index: 3, kind: input, shape index: {}]
  %s4 = inlined_call_operand.vmem [shape: f32[8,1], index: 4, kind: input, shape index: {}]
  %s5 = inlined_call_operand.vmem [shape: f32[8,8], index: 5, kind: input, shape index: {}]
  %s6 = inlined_call_operand.vmem [shape: f32[8,1], index: 6, kind: input, shape index: {}]
  %s7 = inlined_call_operand.hbm [shape: f32[2,8,256], index: 7, kind: output, shape index: {}]
  %s8 = sld [smem:[#allocation0]]
  $region73: #{tpu_custom_call.1} parent=0
    _
  %s10 = ssub.s32 1, %s8
  %s11 = scalar_select 0, %s10, %s8
  $region1: #{tpu_custom_call.1} parent=0
    #allocation2 [shape = 'u8[16384]{0}', space=vmem, size = 0x4000, scoped, tag = 'input window, operand 0']
    #allocation3 [shape = 's32[2]{0}', space=sflag, size = 0x8, scoped, tag = 'scoped memory for tpu_custom_call.1']
    #allocation4 [shape = 's32[2]{0}', space=sflag, size = 0x8, scoped, tag = 'scoped memory for tpu_custom_call.1']
    #allocation5 [shape = 'u8[8192]{0}', space=vmem, size = 0x2000, scoped, tag = 'input window, operand 2, single buffered']
    #allocation6 [shape = 's32[1]{0}', space=sflag, size = 0x4, scoped, tag = 'scoped memory for tpu_custom_call.1']
    #allocation7 [shape = 'u8[4096]{0}', space=vmem, size = 0x1000, scoped, tag = 'input window, operand 3, single buffered']
    #allocation8 [shape = 'u8[16384]{0}', space=vmem, size = 0x4000, scoped, tag = 'output window, operand 0']
    %12 = vsyncpa [#allocation3], 0
    %s13 = scalar_lea.sflag [#allocation3], 1
    %14 = vsyncpa %s13, 0
    %15 = vsyncpa [#allocation6], 0
    %16 = vsyncpa [#allocation4], 0
    %s17 = scalar_lea.sflag [#allocation4], 1
    %18 = vsyncpa %s17, 0
    loop: start=0, step=1, limit=4
    $region2: #{tpu_custom_call.1} parent=1 // loop_pre_header
      _
    $region3: #{tpu_custom_call.1} parent=1 // loop_header
      %s20 = sphi 0, %s24
      %p21 = scmp.ge.s32.totalorder %s20, 4
      %s27 = sphi 0, %s39
      %s28 = sphi 0, %s35
      %s29 = sphi 0, %s27
      %s30 = sphi 0, %s28
      %s31 = sphi 0, %s29
      %s32 = sphi 0, %s30
      %s44 = sphi 0, %s46
      %s47 = sphi 0, %s44
      %s48 = sphi 0, %s47
      %s64 = sphi 0, %s48
      %s70 = sphi 0, %s72
      %s73 = sphi 0, %s70
      %s74 = sphi 0, %s73
      %s90 = sphi 0, %s74
      %s96 = sphi 0, %s98
      %s99 = sphi 0, %s96
      %s100 = sphi 0, %s99
      %s116 = sphi 0, %s100
      %s120 = sphi 0, %s120
      %s122 = sphi 0, %s120
      %s123 = sphi 0, %s122
      %s137 = sphi 0, %s123
      %s141 = sphi 0, %s141
      %s143 = sphi 0, %s141
      %s144 = sphi 0, %s143
      %s158 = sphi 0, %s144
      %s162 = sphi 0, %s162
      %s164 = sphi 0, %s162
      %s165 = sphi 0, %s164
      %s179 = sphi 0, %s165
      %s183 = sphi 0, %s183
      %s185 = sphi 0, %s183
      %s186 = sphi 0, %s185
      %s200 = sphi 0, %s186
      %s208 = sphi 0, %s210
      %s211 = sphi 0, %s208
      %s212 = sphi 0, %s211
      %s228 = sphi 0, %s212
    $region4: #{tpu_custom_call.1} parent=1 // loop_header_branch
      %23 = sbr.rel (%p21) target = $region8
    $region5: #{tpu_custom_call.1} parent=1 // loop_body
      %s25 = ssub.s32 %s20, 1
      %s26 = ssub.s32 %s20, 2
      %s33 = sadd.s32 1, %s28
      %p34 = scmp.ge.s32.totalorder %s33, 2
      %s35 = scalar_select %p34, 0, %s33
      %s36 = sadd.s32 1, %s27
      %s37 = scalar_select %p34, %s36, %s27
      %p38 = scmp.ge.s32.totalorder %s37, 1
      %s39 = scalar_select %p38, 0, %s37
      %s40 = ssub.s32 %s28, %s35
      %s41 = ssub.s32 %s27, %s39
      %s42 = sor.u32 %s40, %s41
      %p43 = scmp.eq.s32.totalorder %s42, 0
      %s45 = sadd.s32 %s44, 1
      %s46 = scalar_select %p43, %s44, %s45
      %p49 = pneg %p43
      %p50 = scmp.eq.s32.totalorder %s20, 1
      %p51 = por %p49, %p50
      %p52 = scmp.ne.s32.totalorder %s44, %s47
      %p53 = scmp.eq.s32.totalorder %s20, 0
      %p54 = por %p52, %p53
      %p55 = scmp.ne.s32.totalorder %s44, %s47
      %p56 = scmp.eq.s32.totalorder %s25, 1
      %p57 = por %p55, %p56
      %p58 = scmp.ne.s32.totalorder %s47, %s48
      %p59 = scmp.eq.s32.totalorder %s25, 0
      %p60 = por %p58, %p59
      %p61 = scmp.ne.s32.totalorder %s47, %s48
      %p62 = scmp.eq.s32.totalorder %s26, 1
      %p63 = por %p61, %p62
      %p65 = scmp.ne.s32.totalorder %s48, %s64
      %p66 = scmp.eq.s32.totalorder %s26, 0
      %p67 = por %p65, %p66
      %s68 = ssub.s32 %s27, %s39
      %p69 = scmp.eq.s32.totalorder %s68, 0
      %s71 = sadd.s32 %s70, 1
      %s72 = scalar_select %p69, %s70, %s71
      %p75 = pneg %p69
      %p76 = scmp.eq.s32.totalorder %s20, 1
      %p77 = por %p75, %p76
      %p78 = scmp.ne.s32.totalorder %s70, %s73
      %p79 = scmp.eq.s32.totalorder %s20, 0
      %p80 = por %p78, %p79
      %p81 = scmp.ne.s32.totalorder %s70, %s73
      %p82 = scmp.eq.s32.totalorder %s25, 1
      %p83 = por %p81, %p82
      %p84 = scmp.ne.s32.totalorder %s73, %s74
      %p85 = scmp.eq.s32.totalorder %s25, 0
      %p86 = por %p84, %p85
      %p87 = scmp.ne.s32.totalorder %s73, %s74
      %p88 = scmp.eq.s32.totalorder %s26, 1
      %p89 = por %p87, %p88
      %p91 = scmp.ne.s32.totalorder %s74, %s90
      %p92 = scmp.eq.s32.totalorder %s26, 0
      %p93 = por %p91, %p92
      %s94 = ssub.s32 %s27, %s39
      %p95 = scmp.eq.s32.totalorder %s94, 0
      %s97 = sadd.s32 %s96, 1
      %s98 = scalar_select %p95, %s96, %s97
      %p101 = pneg %p95
      %p102 = scmp.eq.s32.totalorder %s20, 1
      %p103 = por %p101, %p102
      %p104 = scmp.ne.s32.totalorder %s96, %s99
      %p105 = scmp.eq.s32.totalorder %s20, 0
      %p106 = por %p104, %p105
      %p107 = scmp.ne.s32.totalorder %s96, %s99
      %p108 = scmp.eq.s32.totalorder %s25, 1
      %p109 = por %p107, %p108
      %p110 = scmp.ne.s32.totalorder %s99, %s100
      %p111 = scmp.eq.s32.totalorder %s25, 0
      %p112 = por %p110, %p111
      %p113 = scmp.ne.s32.totalorder %s99, %s100
      %p114 = scmp.eq.s32.totalorder %s26, 1
      %p115 = por %p113, %p114
      %p117 = scmp.ne.s32.totalorder %s100, %s116
      %p118 = scmp.eq.s32.totalorder %s26, 0
      %p119 = por %p117, %p118
      %s121 = sadd.s32 %s120, 1
      %p124 = scmp.eq.s32.totalorder %s20, 1
      %p125 = scmp.ne.s32.totalorder %s120, %s122
      %p126 = scmp.eq.s32.totalorder %s20, 0
      %p127 = por %p125, %p126
      %p128 = scmp.ne.s32.totalorder %s120, %s122
      %p129 = scmp.eq.s32.totalorder %s25, 1
      %p130 = por %p128, %p129
      %p131 = scmp.ne.s32.totalorder %s122, %s123
      %p132 = scmp.eq.s32.totalorder %s25, 0
      %p133 = por %p131, %p132
      %p134 = scmp.ne.s32.totalorder %s122, %s123
      %p135 = scmp.eq.s32.totalorder %s26, 1
      %p136 = por %p134, %p135
      %p138 = scmp.ne.s32.totalorder %s123, %s137
      %p139 = scmp.eq.s32.totalorder %s26, 0
      %p140 = por %p138, %p139
      %s142 = sadd.s32 %s141, 1
      %p145 = scmp.eq.s32.totalorder %s20, 1
      %p146 = scmp.ne.s32.totalorder %s141, %s143
      %p147 = scmp.eq.s32.totalorder %s20, 0
      %p148 = por %p146, %p147
      %p149 = scmp.ne.s32.totalorder %s141, %s143
      %p150 = scmp.eq.s32.totalorder %s25, 1
      %p151 = por %p149, %p150
      %p152 = scmp.ne.s32.totalorder %s143, %s144
      %p153 = scmp.eq.s32.totalorder %s25, 0
      %p154 = por %p152, %p153
      %p155 = scmp.ne.s32.totalorder %s143, %s144
      %p156 = scmp.eq.s32.totalorder %s26, 1
      %p157 = por %p155, %p156
      %p159 = scmp.ne.s32.totalorder %s144, %s158
      %p160 = scmp.eq.s32.totalorder %s26, 0
      %p161 = por %p159, %p160
      %s163 = sadd.s32 %s162, 1
      %p166 = scmp.eq.s32.totalorder %s20, 1
      %p167 = scmp.ne.s32.totalorder %s162, %s164
      %p168 = scmp.eq.s32.totalorder %s20, 0
      %p169 = por %p167, %p168
      %p170 = scmp.ne.s32.totalorder %s162, %s164
      %p171 = scmp.eq.s32.totalorder %s25, 1
      %p172 = por %p170, %p171
      %p173 = scmp.ne.s32.totalorder %s164, %s165
      %p174 = scmp.eq.s32.totalorder %s25, 0
      %p175 = por %p173, %p174
      %p176 = scmp.ne.s32.totalorder %s164, %s165
      %p177 = scmp.eq.s32.totalorder %s26, 1
      %p178 = por %p176, %p177
      %p180 = scmp.ne.s32.totalorder %s165, %s179
      %p181 = scmp.eq.s32.totalorder %s26, 0
      %p182 = por %p180, %p181
      %s184 = sadd.s32 %s183, 1
      %p187 = scmp.eq.s32.totalorder %s20, 1
      %p188 = scmp.ne.s32.totalorder %s183, %s185
      %p189 = scmp.eq.s32.totalorder %s20, 0
      %p190 = por %p188, %p189
      %p191 = scmp.ne.s32.totalorder %s183, %s185
      %p192 = scmp.eq.s32.totalorder %s25, 1
      %p193 = por %p191, %p192
      %p194 = scmp.ne.s32.totalorder %s185, %s186
      %p195 = scmp.eq.s32.totalorder %s25, 0
      %p196 = por %p194, %p195
      %p197 = scmp.ne.s32.totalorder %s185, %s186
      %p198 = scmp.eq.s32.totalorder %s26, 1
      %p199 = por %p197, %p198
      %p201 = scmp.ne.s32.totalorder %s186, %s200
      %p202 = scmp.eq.s32.totalorder %s26, 0
      %p203 = por %p201, %p202
      %s204 = ssub.s32 %s28, %s35
      %s205 = ssub.s32 %s27, %s39
      %s206 = sor.u32 %s204, %s205
      %p207 = scmp.eq.s32.totalorder %s206, 0
      %s209 = sadd.s32 %s208, 1
      %s210 = scalar_select %p207, %s208, %s209
      %p213 = pneg %p207
      %p214 = scmp.eq.s32.totalorder %s20, 1
      %p215 = por %p213, %p214
      %p216 = scmp.ne.s32.totalorder %s208, %s211
      %p217 = scmp.eq.s32.totalorder %s20, 0
      %p218 = por %p216, %p217
      %p219 = scmp.ne.s32.totalorder %s208, %s211
      %p220 = scmp.eq.s32.totalorder %s25, 1
      %p221 = por %p219, %p220
      %p222 = scmp.ne.s32.totalorder %s211, %s212
      %p223 = scmp.eq.s32.totalorder %s25, 0
      %p224 = por %p222, %p223
      %p225 = scmp.ne.s32.totalorder %s211, %s212
      %p226 = scmp.eq.s32.totalorder %s26, 1
      %p227 = por %p225, %p226
      %p229 = scmp.ne.s32.totalorder %s212, %s228
      %p230 = scmp.eq.s32.totalorder %s26, 0
      %p231 = por %p229, %p230
      %p232 = scmp.le.s32.totalorder 1, %s20
      %p233 = scmp.lt.s32.totalorder %s20, 3
      %p234 = pnand %p232, %p233
      %p235 = pneg %p234
      // Predicated region
      $region9: #{tpu_custom_call.1} parent=5 // pred_check
        _
      $region10: #{tpu_custom_call.1} parent=5 // pred_check_branch
        %237 = sbr.rel (%p234) target = $region12
      $region11: #{tpu_custom_call.1} parent=5 // pred_region
        %s238 = ssub.s32 %s20, 1
        // Predicated region
        $region13: #{tpu_custom_call.1} parent=11 // pred_check
          %p239 = pneg %p86
        $region14: #{tpu_custom_call.1} parent=11 // pred_check_branch
          %241 = sbr.rel (%p239) target = $region16
        $region15: #{tpu_custom_call.1} parent=11 // pred_region
          %s242 = smul.u32 2, %s29
          %p243 = scmp.lt.s32.totalorder %s242, 1
          %s244 = scalar_select %p243, %s242, 1
          %s245 = smul.addr %s244, 8
          %s246 = scalar_lea.vmem %s1, %s245
          %s247 = smul.u32 2, %s29
        $region16: #{tpu_custom_call.1} parent=11 // pred_fallthru
          _
        // Predicated region
        $region17: #{tpu_custom_call.1} parent=11 // pred_check
          %p248 = pneg %p112
        $region18: #{tpu_custom_call.1} parent=11 // pred_check_branch
          %250 = sbr.rel (%p248) target = $region20
        $region19: #{tpu_custom_call.1} parent=11 // pred_region
          %s251 = smul.u32 2, %s29
          %s253 = ssub.s32 256, 256
          %254 = vsyncadd [#allocation6], %s253
          %s255 = smul.addr %s251, 128
          %s256 = scalar_lea.hbm %s2, %s255
          %s258 = sshll.u32 [#allocation5], 4
          %s259 = int_to_ptr.vmem [resolvable:$true] %s258
          %261 = dma.hbm_to_vmem [thread:$0]  %s256, 256, %s259, [#allocation6]
        $region20: #{tpu_custom_call.1} parent=11 // pred_fallthru
          _
        // Predicated region
        $region21: #{tpu_custom_call.1} parent=11 // pred_check
          %p262 = pneg %p133
        $region22: #{tpu_custom_call.1} parent=11 // pred_check_branch
          %264 = sbr.rel (%p262) target = $region24
        $region23: #{tpu_custom_call.1} parent=11 // pred_region
          %s266 = ssub.s32 128, 128
          %267 = vsyncadd [#allocation6], %s266
          %s269 = sshll.u32 [#allocation7], 4
          %s270 = int_to_ptr.vmem [resolvable:$true] %s269
          %272 = dma.hbm_to_vmem [thread:$0]  %s3, 128, %s270, [#allocation6]
        $region24: #{tpu_custom_call.1} parent=11 // pred_fallthru
          _
        // Predicated region
        $region25: #{tpu_custom_call.1} parent=11 // pred_check
          %p273 = pneg %p154
        $region26: #{tpu_custom_call.1} parent=11 // pred_check_branch
          %275 = sbr.rel (%p273) target = $region28
        $region27: #{tpu_custom_call.1} parent=11 // pred_region
          _
        $region28: #{tpu_custom_call.1} parent=11 // pred_fallthru
          _
        // Predicated region
        $region29: #{tpu_custom_call.1} parent=11 // pred_check
          %p276 = pneg %p175
        $region30: #{tpu_custom_call.1} parent=11 // pred_check_branch
          %278 = sbr.rel (%p276) target = $region32
        $region31: #{tpu_custom_call.1} parent=11 // pred_region
          _
        $region32: #{tpu_custom_call.1} parent=11 // pred_fallthru
          _
        // Predicated region
        $region33: #{tpu_custom_call.1} parent=11 // pred_check
          %p279 = pneg %p196
        $region34: #{tpu_custom_call.1} parent=11 // pred_check_branch
          %281 = sbr.rel (%p279) target = $region36
        $region35: #{tpu_custom_call.1} parent=11 // pred_region
          _
        $region36: #{tpu_custom_call.1} parent=11 // pred_fallthru
          _
      $region12: #{tpu_custom_call.1} parent=5 // pred_fallthru
        _
      %p282 = scmp.lt.s32.totalorder %s20, 2
      // Predicated region
      $region37: #{tpu_custom_call.1} parent=5 // pred_check
        %p283 = pneg %p282
      $region38: #{tpu_custom_call.1} parent=5 // pred_check_branch
        %285 = sbr.rel (%p283) target = $region40
      $region39: #{tpu_custom_call.1} parent=5 // pred_region
        // Predicated region
        $region41: #{tpu_custom_call.1} parent=39 // pred_check
          %p286 = pneg %p54
        $region42: #{tpu_custom_call.1} parent=39 // pred_check_branch
          %288 = sbr.rel (%p286) target = $region44
        $region43: #{tpu_custom_call.1} parent=39 // pred_region
          %s289 = sand.u32 %s44, 1
          %s290 = scalar_lea.sflag [#allocation3], %s289
          %s291 = sand.u32 %s44, 1
          %s292 = smul.addr %s291, 16
          %s293 = scalar_lea.vmem [#allocation2], %s292
          %s294 = smul.u32 2, %s27
          %s296 = ssub.s32 256, 256
          %297 = vsyncadd %s290, %s296
          %s298 = smul.addr %s28, 2
          %s299 = sadd.s32 %s294, %s298
          %s300 = smul.addr %s299, 128
          %s301 = scalar_lea.hbm %s0, %s300
          %s303 = sshll.u32 %s293, 4
          %s304 = int_to_ptr.vmem [resolvable:$true] %s303
          %306 = dma.hbm_to_vmem [thread:$0]  %s301, 256, %s304, %s290
        $region44: #{tpu_custom_call.1} parent=39 // pred_fallthru
          _
      $region40: #{tpu_custom_call.1} parent=5 // pred_fallthru
        _
      %p307 = scmp.le.s32.totalorder 1, %s20
      %p308 = scmp.lt.s32.totalorder %s20, 3
      %p309 = pnand %p307, %p308
      %p310 = pneg %p309
      // Predicated region
      $region45: #{tpu_custom_call.1} parent=5 // pred_check
        _
      $region46: #{tpu_custom_call.1} parent=5 // pred_check_branch
        %312 = sbr.rel (%p309) target = $region48
      $region47: #{tpu_custom_call.1} parent=5 // pred_region
        %s313 = ssub.s32 %s20, 1
        %s314 = sand.u32 %s47, 1
        %s315 = scalar_lea.sflag [#allocation3], %s314
        %s316 = sand.u32 %s47, 1
        %s317 = smul.addr %s316, 16
        %s318 = scalar_lea.vmem [#allocation2], %s317
        // Predicated region
        $region49: #{tpu_custom_call.1} parent=47 // pred_check
          %p319 = pneg %p60
        $region50: #{tpu_custom_call.1} parent=47 // pred_check_branch
          %321 = sbr.rel (%p319) target = $region52
        $region51: #{tpu_custom_call.1} parent=47 // pred_region
          %322 = dma.done %s315, 256
        $region52: #{tpu_custom_call.1} parent=47 // pred_fallthru
          _
        // Predicated region
        $region53: #{tpu_custom_call.1} parent=47 // pred_check
          %p323 = pneg %p112
        $region54: #{tpu_custom_call.1} parent=47 // pred_check_branch
          %325 = sbr.rel (%p323) target = $region56
        $region55: #{tpu_custom_call.1} parent=47 // pred_region
          %326 = dma.done [#allocation6], 256
        $region56: #{tpu_custom_call.1} parent=47 // pred_fallthru
          _
        // Predicated region
        $region57: #{tpu_custom_call.1} parent=47 // pred_check
          %p327 = pneg %p133
        $region58: #{tpu_custom_call.1} parent=47 // pred_check_branch
          %329 = sbr.rel (%p327) target = $region60
        $region59: #{tpu_custom_call.1} parent=47 // pred_region
          %330 = dma.done [#allocation6], 128
        $region60: #{tpu_custom_call.1} parent=47 // pred_fallthru
          _
        %s331 = sand.u32 %s47, 1
        %s332 = scalar_lea.sflag [#allocation3], %s331
        %s333 = sand.u32 %s47, 1
        %s334 = smul.addr %s333, 16
        %s335 = scalar_lea.vmem [#allocation2], %s334
        %p336 = pneg %p60
        %p337 = pneg %p57
        %s338 = smul.u32 2, %s29
        %p339 = scmp.lt.s32.totalorder %s338, 1
        %s340 = scalar_select %p339, %s338, 1
        %s341 = smul.addr %s340, 8
        %s342 = scalar_lea.vmem %s1, %s341
        %p343 = pneg %p86
        %p344 = pneg %p83
        %p345 = pneg %p112
        %p346 = pneg %p109
        %p347 = pneg %p133
        %p348 = pneg %p130
        %p349 = pneg %p154
        %p350 = pneg %p151
        %p351 = pneg %p175
        %p352 = pneg %p172
        %p353 = pneg %p196
        %p354 = pneg %p193
        %p355 = pneg %p224
        %p356 = pneg %p221
        %s357 = sand.u32 %s211, 1
        %s358 = scalar_lea.sflag [#allocation4], %s357
        %s359 = sand.u32 %s211, 1
        %s360 = smul.addr %s359, 16
        %s361 = scalar_lea.vmem [#allocation8], %s360
        %s362 = smul.u32 2, %s29
        %s363 = smul.u32 2, %s29
        %p364 = scmp.lt.s32.totalorder %s363, 1
        %s365 = scalar_select %p364, %s363, 1
        %s366 = smul.addr %s365, 8
        %s367 = scalar_lea.vmem %s1, %s366
        %s368 = smul.u32 2, %s29
        %s369 = smul.u32 2, %s29
        %s370 = smul.u32 2, %s29
        %v371 = vld [vmem:[%s318] sm:$0xff]
        %v372 = vld [vmem:[%s318 + $0x8] sm:$0xff]
        %v373 = vld [vmem:[%s367] sm:$0xff]
        %v374 = vld [vmem:[%s367 + $0x8] sm:$0xff]
        %v375 = vadd.f32 %v371, %v373
        %v376 = vadd.f32 %v372, %v374
        %v377 = vmax.f32 %v375, 0.0
        %v378 = vmax.f32 %v376, 0.0
        %v379 = vld [vmem:[#allocation7] sm:$0xff]
        %v380 = vld [vmem:[%s4] sm:$0xff]
        %382 = vset.pattern.permute.xlu0 0
        %383 = vperm.xlu0 %382, %v380
        %v384 = vpop.permute.xlu0 %383
        %vm386 = vcmask 64512
        %v388 = vsel %vm386, %v379, 0
        %390 = vmatprep.subr.mxu0 0.0
        %391 = vmatpush1.msra.mxu0 0.0
        %392 = vmatprep.subr.mxu0 0.0
        %393 = vmatpush1.msra.mxu0 0.0
        %394 = vmatprep.subr.mxu0 0.0
        %395 = vmatpush1.msra.mxu0 0.0
        %396 = vmatprep.subr.mxu0 0.0
        %397 = vmatpush1.msra.mxu0 0.0
        %398 = vmatprep.subr.mxu0 0.0
        %399 = vmatpush1.msra.mxu0 0.0
        %400 = vmatprep.subr.mxu0 0.0
        %401 = vmatpush1.msra.mxu0 0.0
        %402 = vmatprep.subr.mxu0 0.0
        %403 = vmatpush1.msra.mxu0 0.0
        %404 = vmatprep.subr.mxu0 0.0
        %405 = vmatpush1.msra.mxu0 0.0
        %406 = vmatprep.subr.mxu0 0.0
        %407 = vmatpush1.msra.mxu0 0.0
        %408 = vmatprep.subr.mxu0 0.0
        %409 = vmatpush1.msra.mxu0 0.0
        %410 = vmatprep.subr.mxu0 0.0
        %411 = vmatpush1.msra.mxu0 0.0
        %412 = vmatprep.subr.mxu0 0.0
        %413 = vmatpush1.msra.mxu0 0.0
        %414 = vmatprep.subr.mxu0 0.0
        %415 = vmatpush1.msra.mxu0 0.0
        %416 = vmatprep.subr.mxu0 0.0
        %417 = vmatpush1.msra.mxu0 0.0
        %418 = vmatprep.subr.mxu0 0.0
        %419 = vmatpush1.msra.mxu0 0.0
        %420 = vmatprep.subr.mxu0 %v378
        %421 = vmatpush1.msra.mxu0 %v377
        %422 = vmatprep.subr.mxu0 0.0
        %423 = vmatpush2.msra.mxu0 0.0
        %424 = vmatprep.subr.mxu0 0.0
        %425 = vmatpush2.msra.mxu0 0.0
        %426 = vmatprep.subr.mxu0 0.0
        %427 = vmatpush2.msra.mxu0 0.0
        %428 = vmatprep.subr.mxu0 0.0
        %429 = vmatpush2.msra.mxu0 0.0
        %430 = vmatprep.subr.mxu0 0.0
        %431 = vmatpush2.msra.mxu0 0.0
        %432 = vmatprep.subr.mxu0 0.0
        %433 = vmatpush2.msra.mxu0 0.0
        %434 = vmatprep.subr.mxu0 0.0
        %435 = vmatpush2.msra.mxu0 0.0
        %436 = vmatprep.subr.mxu0 0.0
        %437 = vmatpush2.msra.mxu0 0.0
        %438 = vmatprep.subr.mxu0 0.0
        %439 = vmatpush2.msra.mxu0 0.0
        %440 = vmatprep.subr.mxu0 0.0
        %441 = vmatpush2.msra.mxu0 0.0
        %442 = vmatprep.subr.mxu0 0.0
        %443 = vmatpush2.msra.mxu0 0.0
        %444 = vmatprep.subr.mxu0 0.0
        %445 = vmatpush2.msra.mxu0 0.0
        %446 = vmatprep.subr.mxu0 0.0
        %447 = vmatpush2.msra.mxu0 0.0
        %448 = vmatprep.subr.mxu0 0.0
        %449 = vmatpush2.msra.mxu0 0.0
        %450 = vmatprep.subr.mxu0 0.0
        %451 = vmatpush2.msra.mxu0 0.0
        %452 = vmatprep.subr.mxu0 0.0
        %453 = vmatpush2.msra.mxu0 0.0
        %454 = vmatprep.mubr.f32.mxu0 0.0
        %455 = vmatmul.mubr.f32.gmra.mxu0 %v388
        %v456 = vpop.f32.mrf.mxu0
        %v457 = vadd.f32 %v384, %v456
        %v458 = vpop.f32.mrf.mxu0
        %v459 = vadd.f32 %v384, %v458
        %460 = vdwg.mxu0
        %v461 = vmax.f32 %v457, 0.0
        %v462 = vmax.f32 %v459, 0.0
        %v463 = vld [vmem:[#allocation5] sm:$0xff]
        %v464 = vld [vmem:[#allocation5 + $0x8] sm:$0xff]
        %v465 = vadd.f32 %v461, %v463
        %v466 = vadd.f32 %v462, %v464
        %v467 = vmax.f32 %v465, 0.0
        %v468 = vmax.f32 %v466, 0.0
        %v469 = vld [vmem:[%s5] sm:$0xff]
        %v470 = vld [vmem:[%s6] sm:$0xff]
        %472 = vset.pattern.permute.xlu0 0
        %473 = vperm.xlu0 %472, %v470
        %v474 = vpop.permute.xlu0 %473
        %v477 = vsel %vm386, %v469, 0
        %479 = vmatprep.subr.mxu0 0.0
        %480 = vmatpush1.msra.mxu0 0.0
        %481 = vmatprep.subr.mxu0 0.0
        %482 = vmatpush1.msra.mxu0 0.0
        %483 = vmatprep.subr.mxu0 0.0
        %484 = vmatpush1.msra.mxu0 0.0
        %485 = vmatprep.subr.mxu0 0.0
        %486 = vmatpush1.msra.mxu0 0.0
        %487 = vmatprep.subr.mxu0 0.0
        %488 = vmatpush1.msra.mxu0 0.0
        %489 = vmatprep.subr.mxu0 0.0
        %490 = vmatpush1.msra.mxu0 0.0
        %491 = vmatprep.subr.mxu0 0.0
        %492 = vmatpush1.msra.mxu0 0.0
        %493 = vmatprep.subr.mxu0 0.0
        %494 = vmatpush1.msra.mxu0 0.0
        %495 = vmatprep.subr.mxu0 0.0
        %496 = vmatpush1.msra.mxu0 0.0
        %497 = vmatprep.subr.mxu0 0.0
        %498 = vmatpush1.msra.mxu0 0.0
        %499 = vmatprep.subr.mxu0 0.0
        %500 = vmatpush1.msra.mxu0 0.0
        %501 = vmatprep.subr.mxu0 0.0
        %502 = vmatpush1.msra.mxu0 0.0
        %503 = vmatprep.subr.mxu0 0.0
        %504 = vmatpush1.msra.mxu0 0.0
        %505 = vmatprep.subr.mxu0 0.0
        %506 = vmatpush1.msra.mxu0 0.0
        %507 = vmatprep.subr.mxu0 0.0
        %508 = vmatpush1.msra.mxu0 0.0
        %509 = vmatprep.subr.mxu0 %v468
        %510 = vmatpush1.msra.mxu0 %v467
        %511 = vmatprep.subr.mxu0 0.0
        %512 = vmatpush2.msra.mxu0 0.0
        %513 = vmatprep.subr.mxu0 0.0
        %514 = vmatpush2.msra.mxu0 0.0
        %515 = vmatprep.subr.mxu0 0.0
        %516 = vmatpush2.msra.mxu0 0.0
        %517 = vmatprep.subr.mxu0 0.0
        %518 = vmatpush2.msra.mxu0 0.0
        %519 = vmatprep.subr.mxu0 0.0
        %520 = vmatpush2.msra.mxu0 0.0
        %521 = vmatprep.subr.mxu0 0.0
        %522 = vmatpush2.msra.mxu0 0.0
        %523 = vmatprep.subr.mxu0 0.0
        %524 = vmatpush2.msra.mxu0 0.0
        %525 = vmatprep.subr.mxu0 0.0
        %526 = vmatpush2.msra.mxu0 0.0
        %527 = vmatprep.subr.mxu0 0.0
        %528 = vmatpush2.msra.mxu0 0.0
        %529 = vmatprep.subr.mxu0 0.0
        %530 = vmatpush2.msra.mxu0 0.0
        %531 = vmatprep.subr.mxu0 0.0
        %532 = vmatpush2.msra.mxu0 0.0
        %533 = vmatprep.subr.mxu0 0.0
        %534 = vmatpush2.msra.mxu0 0.0
        %535 = vmatprep.subr.mxu0 0.0
        %536 = vmatpush2.msra.mxu0 0.0
        %537 = vmatprep.subr.mxu0 0.0
        %538 = vmatpush2.msra.mxu0 0.0
        %539 = vmatprep.subr.mxu0 0.0
        %540 = vmatpush2.msra.mxu0 0.0
        %541 = vmatprep.subr.mxu0 0.0
        %542 = vmatpush2.msra.mxu0 0.0
        %543 = vmatprep.mubr.f32.mxu0 0.0
        %544 = vmatmul.mubr.f32.gmra.mxu0 %v477
        %v545 = vpop.f32.mrf.mxu0
        %v546 = vadd.f32 %v474, %v545
        %v547 = vpop.f32.mrf.mxu0
        %v548 = vadd.f32 %v474, %v547
        %549 = vdwg.mxu0
        %v550 = vadd.f32 %v546, %v371
        %v551 = vadd.f32 %v548, %v372
        %v552 = vmax.f32 %v550, 0.0
        %v553 = vmax.f32 %v551, 0.0
        %554 = vst [vmem:[%s361] sm:$0xff] %v552
        %555 = vst [vmem:[%s361 + $0x8] sm:$0xff] %v553
        %s556 = sand.u32 %s211, 1
        %s557 = scalar_lea.sflag [#allocation4], %s556
        %s558 = sand.u32 %s211, 1
        %s559 = smul.addr %s558, 16
        %s560 = scalar_lea.vmem [#allocation8], %s559
        // Predicated region
        $region61: #{tpu_custom_call.1} parent=47 // pred_check
          %p561 = pneg %p221
        $region62: #{tpu_custom_call.1} parent=47 // pred_check_branch
          %563 = sbr.rel (%p561) target = $region64
        $region63: #{tpu_custom_call.1} parent=47 // pred_region
          %s564 = smul.u32 2, %s29
          %s566 = ssub.s32 256, 256
          %567 = vsyncadd %s557, %s566
          %s568 = smul.addr %s30, 2
          %s569 = sadd.s32 %s564, %s568
          %s570 = smul.addr %s569, 128
          %s571 = scalar_lea.hbm %s7, %s570
          %s573 = sshll.u32 %s560, 4
          %s574 = int_to_ptr.vmem [resolvable:$true] %s573
          %576 = dma.vmem_to_hbm [thread:$0]  %s574, 256, %s571, %s557
        $region64: #{tpu_custom_call.1} parent=47 // pred_fallthru
          _
      $region48: #{tpu_custom_call.1} parent=5 // pred_fallthru
        _
      %p577 = scmp.le.s32.totalorder 2, %s20
      // Predicated region
      $region65: #{tpu_custom_call.1} parent=5 // pred_check
        %p578 = pneg %p577
      $region66: #{tpu_custom_call.1} parent=5 // pred_check_branch
        %580 = sbr.rel (%p578) target = $region68
      $region67: #{tpu_custom_call.1} parent=5 // pred_region
        %s581 = ssub.s32 %s20, 2
        // Predicated region
        $region69: #{tpu_custom_call.1} parent=67 // pred_check
          %p582 = pneg %p227
        $region70: #{tpu_custom_call.1} parent=67 // pred_check_branch
          %584 = sbr.rel (%p582) target = $region72
        $region71: #{tpu_custom_call.1} parent=67 // pred_region
          %s585 = sand.u32 %s212, 1
          %s586 = scalar_lea.sflag [#allocation4], %s585
          %s587 = sand.u32 %s212, 1
          %s588 = smul.addr %s587, 16
          %s589 = scalar_lea.vmem [#allocation8], %s588
          %590 = dma.done %s586, 256
        $region72: #{tpu_custom_call.1} parent=67 // pred_fallthru
          _
      $region68: #{tpu_custom_call.1} parent=5 // pred_fallthru
        _
    $region6: #{tpu_custom_call.1} parent=1 // loop_footer
      %s24 = sadd.s32 1, %s20
    $region7: #{tpu_custom_call.1} parent=1 // loop_footer_branch
      %19 = sbr.rel target = $region3
    $region8: #{tpu_custom_call.1} parent=1 // loop_exit
      _
    %591 = vsyncpa [#allocation3], 1
    %s592 = scalar_lea.sflag [#allocation3], 1
    %593 = vsyncpa %s592, 1
    %594 = vsyncpa [#allocation6], 1
    %595 = vsyncpa [#allocation4], 1
    %s596 = scalar_lea.sflag [#allocation4], 1
    %597 = vsyncpa %s596, 1

</llo_original>
